<compile_context>
chip_gen: v6e
topology: v6e:2x2x1
jax: 0.10.0
libtpu: 0.0.40
codegen_flags: <defaults>
</compile_context>

<pallas_src>
import jax
import jax.numpy as jnp
from jax.experimental import pallas as pl
from jax.experimental.pallas import tpu as pltpu

H1 = 512                       # hidden width of layer 1
H2 = 256                       # hidden width of layer 2
OUT_PAD = 128                  # final layer padded 1 -> 128 lanes (lane-dense store)
W1_RESIDENT_BYTES = 16 << 20   # keep w1 fully VMEM-resident up to this size (bf16)
W1_TK = 4096                   # layer-1 K tile once w1 is streamed (4 MiB/slab bf16)


def _round_up(x, m):
    return ((x + m - 1) // m) * m


def _leaky_relu(x, slope=0.2):
    # max(x, slope*x): 2 VALU ops (mul+max) instead of mul+cmp+select.
    return jnp.maximum(x, slope * x)


def discriminator_kernel(x_ref, w1_ref, b1_ref, w2_ref, b2_ref, w3_ref, b3_ref,
                         o_ref, acc_ref):
    """Grid = (batch_tiles, k_tiles).

    Layer 1 accumulates over the k axis into an f32 VMEM scratch; layers 2/3,
    bias adds, LeakyReLU and the sigmoid run on the last k step only.
    """
    k = pl.program_id(1)

    @pl.when(k == 0)
    def _init():
        acc_ref[...] = jnp.zeros_like(acc_ref)

    # Linear(F -> 512): bf16 MXU matmul, f32 accumulation.
    acc_ref[...] += jnp.dot(x_ref[...], w1_ref[...],
                            preferred_element_type=jnp.float32)

    @pl.when(k == pl.num_programs(1) - 1)
    def _finalize():
        h1 = _leaky_relu(acc_ref[...] + b1_ref[...])

        # Linear(512 -> 256) + LeakyReLU(0.2)
        h2 = jnp.dot(h1.astype(jnp.bfloat16), w2_ref[...],
                     preferred_element_type=jnp.float32)
        h2 = _leaky_relu(h2 + b2_ref[...])

        # Linear(256 -> 1), padded to 128 output lanes, + stable sigmoid.
        logits = jnp.dot(h2.astype(jnp.bfloat16), w3_ref[...],
                         preferred_element_type=jnp.float32) + b3_ref[...]
        z = jnp.exp(-jnp.abs(logits))                 # exp of non-positive arg
        inv = pl.reciprocal(1.0 + z, approx=True)     # EUP slot, ~free next to exp
        o_ref[...] = jnp.where(logits >= 0, inv, z * inv)


def _batch_tiling(B):
    """Pick (TM, B_pad): >=2 batch tiles whenever the batch is big enough
    (megacore sharding + DMA/compute overlap), TM <= 256, minimal padding."""
    B8 = _round_up(B, 8)
    n_tiles = max(pl.cdiv(B8, 256), 2) if B8 >= 16 else 1
    TM = _round_up(pl.cdiv(B, n_tiles), 8)
    B_pad = _round_up(B, TM)
    return TM, B_pad


@jax.jit
def discriminator_forward(img, params):
    """img: (B, C, H, W) float32. Returns validity (B, 1) float32."""
    w1, b1, w2, b2, w3, b3 = params
    B = img.shape[0]
    x = img.reshape(B, -1)                         # == img.view(B, -1) (NCHW row-major)
    F = x.shape[1]

    # --- tiling choices ------------------------------------------------------
    TM, B_pad = _batch_tiling(B)
    nb = B_pad // TM

    F128 = _round_up(F, 128)
    if F128 * H1 * 2 <= W1_RESIDENT_BYTES:
        TK = F128                                  # w1 fully VMEM-resident, nk == 1
    else:
        TK = W1_TK                                 # stream w1 in (TK, 512) slabs
    F_pad = _round_up(F, TK)
    nk = F_pad // TK
    grid = (nb, nk)

    # --- operand preparation (single cast pass; pad only if needed) ----------
    x_p = x.astype(jnp.bfloat16)
    if B_pad != B or F_pad != F:
        x_p = jnp.pad(x_p, ((0, B_pad - B), (0, F_pad - F)))

    w1_p = w1.astype(jnp.bfloat16)
    if F_pad != F:
        w1_p = jnp.pad(w1_p, ((0, F_pad - F), (0, 0)))
    w2_b = w2.astype(jnp.bfloat16)
    w3_p = jnp.pad(w3.astype(jnp.bfloat16), ((0, 0), (0, OUT_PAD - w3.shape[1])))
    b1_f = b1.astype(jnp.float32)
    b2_f = b2.astype(jnp.float32)
    b3_p = jnp.pad(b3.astype(jnp.float32), ((0, 0), (0, OUT_PAD - b3.shape[1])))

    # --- BlockSpecs -----------------------------------------------------------
    const_map = lambda i, k: (0, 0)
    if nk == 1:
        # Constant block -> single-buffered, DMA'd once, resident for the grid.
        w1_spec = pl.BlockSpec((TK, H1), const_map, pipeline_mode=pl.Buffered(1))
    else:
        # Streamed along k -> keep default double-buffering for overlap.
        w1_spec = pl.BlockSpec((TK, H1), lambda i, k: (k, 0))

    in_specs = [
        pl.BlockSpec((TM, TK), lambda i, k: (i, k)),                        # x
        w1_spec,                                                            # w1
        pl.BlockSpec((1, H1), const_map, pipeline_mode=pl.Buffered(1)),     # b1
        pl.BlockSpec((H1, H2), const_map, pipeline_mode=pl.Buffered(1)),    # w2
        pl.BlockSpec((1, H2), const_map, pipeline_mode=pl.Buffered(1)),     # b2
        pl.BlockSpec((H2, OUT_PAD), const_map, pipeline_mode=pl.Buffered(1)),  # w3
        pl.BlockSpec((1, OUT_PAD), const_map, pipeline_mode=pl.Buffered(1)),   # b3
    ]
    out_specs = pl.BlockSpec((TM, OUT_PAD), lambda i, k: (i, 0))

    # --- VMEM budget + cost hint ---------------------------------------------
    w1_tile_bytes = TK * H1 * 2 * (1 if nk == 1 else 2)
    const_bytes = (H1 * H2 + H2 * OUT_PAD) * 2 + (H1 + H2 + OUT_PAD) * 4
    x_tile_bytes = 2 * TM * TK * 2
    out_tile_bytes = 2 * TM * OUT_PAD * 4
    acc_bytes = TM * H1 * 4
    needed = w1_tile_bytes + const_bytes + x_tile_bytes + out_tile_bytes + acc_bytes
    vmem_limit = int(min(max(needed + (8 << 20), 32 << 20), 56 << 20))

    w1_hbm_reads = F_pad * H1 * 2 * (1 if nk == 1 else nb)
    cost = pl.CostEstimate(
        flops=2 * B_pad * (F_pad * H1 + H1 * H2 + H2 * OUT_PAD),
        transcendentals=B_pad * OUT_PAD,
        bytes_accessed=(B_pad * F_pad * 2 + w1_hbm_reads
                        + (H1 * H2 + H2 * OUT_PAD) * 2
                        + (H1 + H2 + OUT_PAD) * 4
                        + B_pad * OUT_PAD * 4),
    )

    out = pl.pallas_call(
        discriminator_kernel,
        out_shape=jax.ShapeDtypeStruct((B_pad, OUT_PAD), jnp.float32),
        grid=grid,
        in_specs=in_specs,
        out_specs=out_specs,
        scratch_shapes=[pltpu.VMEM((TM, H1), jnp.float32)],   # layer-1 f32 accumulator
        compiler_params=pltpu.CompilerParams(
            dimension_semantics=("parallel", "arbitrary"),    # batch sharded on v7x
            vmem_limit_bytes=vmem_limit,
        ),
        cost_estimate=cost,
    )(x_p, w1_p, b1_f, w2_b, b2_f, w3_p, b3_p)

    return out[:B, :1]


def init_params(key, in_features):
    """Deterministic init mimicking torch.nn.Linear defaults:
    U(-1/sqrt(fan_in), 1/sqrt(fan_in)). Weights stored as (in, out)."""
    dims = [(in_features, H1), (H1, H2), (H2, 1)]
    params = []
    for i, (fan_in, fan_out) in enumerate(dims):
        kw, kb = jax.random.split(jax.random.fold_in(key, i))
        bound = 1.0 / (fan_in ** 0.5)
        w = jax.random.uniform(kw, (fan_in, fan_out), jnp.float32, -bound, bound)
        b = jax.random.uniform(kb, (1, fan_out), jnp.float32, -bound, bound)
        params += [w, b]
    return tuple(params)


def _reference_forward(img, params):
    """Pure-JAX f32 reference, identical math to the PyTorch module."""
    w1, b1, w2, b2, w3, b3 = params
    x = img.reshape(img.shape[0], -1)
    h = x @ w1 + b1
    h = jnp.where(h > 0, h, 0.2 * h)
    h = h @ w2 + b2
    h = jnp.where(h > 0, h, 0.2 * h)
    return jax.nn.sigmoid(h @ w3 + b3)


if __name__ == "__main__":
    key = jax.random.PRNGKey(0)
    k_img, k_par = jax.random.split(key)

    # Small, module-consistent shapes: image_shape = (1, 16, 16), batch = 2.
    image_shape = (1, 16, 16)
    B = 2
    in_features = 1 * 16 * 16  # prod(image_shape) = 256

    img = jax.random.normal(k_img, (B,) + image_shape, dtype=jnp.float32)
    params = init_params(k_par, in_features)

    validity = discriminator_forward(img, params)
    jax.block_until_ready(validity)

    # Sanity: sigmoid output in (0, 1), shape (B, 1), matches f32 reference
    # within bf16-matmul tolerance (documented: ~5e-2 abs vs f32 PyTorch).
    assert validity.shape == (B, 1)
    assert bool(jnp.all((validity > 0.0) & (validity < 1.0)))
    ref = _reference_forward(img, params)
    assert bool(jnp.allclose(validity, ref, atol=5e-2)), (
        f"max err {float(jnp.max(jnp.abs(validity - ref)))}")

    print("KERNEL_OK")
</pallas_src>

<mosaic_0001>
module attributes {stable_mosaic.version = 11 : i64} {
  func.func @discriminator_kernel(%arg0: i32, %arg1: i32, %arg2: memref<8x256xbf16, #tpu.memory_space<vmem>>, %arg3: memref<256x512xbf16, #tpu.memory_space<vmem>>, %arg4: memref<1x512xf32, #tpu.memory_space<vmem>>, %arg5: memref<512x256xbf16, #tpu.memory_space<vmem>>, %arg6: memref<1x256xf32, #tpu.memory_space<vmem>>, %arg7: memref<256x128xbf16, #tpu.memory_space<vmem>>, %arg8: memref<1x128xf32, #tpu.memory_space<vmem>>, %arg9: memref<8x128xf32, #tpu.memory_space<vmem>>, %arg10: memref<8x512xf32, #tpu.memory_space<vmem>>) attributes {dimension_semantics = [#tpu.dimension_semantics<parallel>, #tpu.dimension_semantics<arbitrary>], iteration_bounds = array<i64: 1, 1>, scalar_prefetch = 0 : i64, scratch_operands = 1 : i64, tpu.core_type = #tpu.core_type<tc>, window_params = [{transform_indices = @transform_0, window_bounds = array<i64: 8, 256>}, {pipeline_mode = #tpu.pipeline_mode<synchronous>, transform_indices = @transform_1, window_bounds = array<i64: 256, 512>}, {pipeline_mode = #tpu.pipeline_mode<synchronous>, transform_indices = @transform_2, window_bounds = array<i64: 1, 512>}, {pipeline_mode = #tpu.pipeline_mode<synchronous>, transform_indices = @transform_3, window_bounds = array<i64: 512, 256>}, {pipeline_mode = #tpu.pipeline_mode<synchronous>, transform_indices = @transform_4, window_bounds = array<i64: 1, 256>}, {pipeline_mode = #tpu.pipeline_mode<synchronous>, transform_indices = @transform_5, window_bounds = array<i64: 256, 128>}, {pipeline_mode = #tpu.pipeline_mode<synchronous>, transform_indices = @transform_6, window_bounds = array<i64: 1, 128>}, {transform_indices = @transform_7, window_bounds = array<i64: 8, 128>}]} {
    %c0_i32 = arith.constant 0 : i32
    %0 = arith.cmpi eq, %arg1, %c0_i32 : i32
    %1 = arith.extui %0 : i1 to i32
    %c0_i32_0 = arith.constant 0 : i32
    %2 = arith.cmpi ne, %1, %c0_i32_0 : i32
    scf.if %2 {
      %cst_10 = arith.constant 0.000000e+00 : f32
      %12 = vector.broadcast %cst_10 : f32 to vector<8x512xf32>
      %c0_11 = arith.constant 0 : index
      %c0_12 = arith.constant 0 : index
      %13 = vector.load %arg10[%c0_11, %c0_12] : memref<8x512xf32, #tpu.memory_space<vmem>>, vector<8x512xf32>
      tpu.vector_store %arg10[%c0_11, %c0_12], %12 {strides = array<i32>} : memref<8x512xf32, #tpu.memory_space<vmem>>, vector<8x512xf32>,
    } else {
    }
    %c0 = arith.constant 0 : index
    %c0_1 = arith.constant 0 : index
    %3 = vector.load %arg10[%c0, %c0_1] : memref<8x512xf32, #tpu.memory_space<vmem>>, vector<8x512xf32>
    %c0_2 = arith.constant 0 : index
    %c0_3 = arith.constant 0 : index
    %4 = vector.load %arg2[%c0_2, %c0_3] : memref<8x256xbf16, #tpu.memory_space<vmem>>, vector<8x256xbf16>
    %c0_4 = arith.constant 0 : index
    %c0_5 = arith.constant 0 : index
    %5 = vector.load %arg3[%c0_4, %c0_5] : memref<256x512xbf16, #tpu.memory_space<vmem>>, vector<256x512xbf16>
    %cst = arith.constant dense<0.000000e+00> : vector<8x512xf32>
    %6 = tpu.matmul %4, %5, %cst {dimension_numbers = #tpu.dot_dimension_numbers<[1], [0], [0], [1], [0, 0, 1, 1], [], []>} : vector<8x256xbf16>, vector<256x512xbf16>, vector<8x512xf32> -> vector<8x512xf32>
    %7 = arith.addf %3, %6 : vector<8x512xf32>
    %c0_6 = arith.constant 0 : index
    %c0_7 = arith.constant 0 : index
    %8 = vector.load %arg10[%c0_6, %c0_7] : memref<8x512xf32, #tpu.memory_space<vmem>>, vector<8x512xf32>
    tpu.vector_store %arg10[%c0_6, %c0_7], %7 {strides = array<i32>} : memref<8x512xf32, #tpu.memory_space<vmem>>, vector<8x512xf32>,
    %c0_i32_8 = arith.constant 0 : i32
    %9 = arith.cmpi eq, %arg1, %c0_i32_8 : i32
    %10 = arith.extui %9 : i1 to i32
    %c0_i32_9 = arith.constant 0 : i32
    %11 = arith.cmpi ne, %10, %c0_i32_9 : i32
    scf.if %11 {
      %c0_10 = arith.constant 0 : index
      %c0_11 = arith.constant 0 : index
      %12 = vector.load %arg10[%c0_10, %c0_11] : memref<8x512xf32, #tpu.memory_space<vmem>>, vector<8x512xf32>
      %c0_12 = arith.constant 0 : index
      %c0_13 = arith.constant 0 : index
      %13 = vector.load %arg4[%c0_12, %c0_13] : memref<1x512xf32, #tpu.memory_space<vmem>>, vector<1x512xf32>
      %14 = vector.broadcast %13 : vector<1x512xf32> to vector<8x512xf32>
      %15 = arith.addf %12, %14 : vector<8x512xf32>
      %cst_14 = arith.constant 2.000000e-01 : f32
      %16 = vector.broadcast %cst_14 : f32 to vector<8x512xf32>
      %17 = arith.mulf %16, %15 : vector<8x512xf32>
      %18 = arith.maximumf %15, %17 : vector<8x512xf32>
      %19 = arith.truncf %18 : vector<8x512xf32> to vector<8x512xbf16>
      %c0_15 = arith.constant 0 : index
      %c0_16 = arith.constant 0 : index
      %20 = vector.load %arg5[%c0_15, %c0_16] : memref<512x256xbf16, #tpu.memory_space<vmem>>, vector<512x256xbf16>
      %cst_17 = arith.constant dense<0.000000e+00> : vector<8x256xf32>
      %21 = tpu.matmul %19, %20, %cst_17 {dimension_numbers = #tpu.dot_dimension_numbers<[1], [0], [0], [1], [0, 0, 1, 1], [], []>} : vector<8x512xbf16>, vector<512x256xbf16>, vector<8x256xf32> -> vector<8x256xf32>
      %c0_18 = arith.constant 0 : index
      %c0_19 = arith.constant 0 : index
      %22 = vector.load %arg6[%c0_18, %c0_19] : memref<1x256xf32, #tpu.memory_space<vmem>>, vector<1x256xf32>
      %23 = vector.broadcast %22 : vector<1x256xf32> to vector<8x256xf32>
      %24 = arith.addf %21, %23 : vector<8x256xf32>
      %cst_20 = arith.constant 2.000000e-01 : f32
      %25 = vector.broadcast %cst_20 : f32 to vector<8x256xf32>
      %26 = arith.mulf %25, %24 : vector<8x256xf32>
      %27 = arith.maximumf %24, %26 : vector<8x256xf32>
      %28 = arith.truncf %27 : vector<8x256xf32> to vector<8x256xbf16>
      %c0_21 = arith.constant 0 : index
      %c0_22 = arith.constant 0 : index
      %29 = vector.load %arg7[%c0_21, %c0_22] : memref<256x128xbf16, #tpu.memory_space<vmem>>, vector<256x128xbf16>
      %cst_23 = arith.constant dense<0.000000e+00> : vector<8x128xf32>
      %30 = tpu.matmul %28, %29, %cst_23 {dimension_numbers = #tpu.dot_dimension_numbers<[1], [0], [0], [1], [0, 0, 1, 1], [], []>} : vector<8x256xbf16>, vector<256x128xbf16>, vector<8x128xf32> -> vector<8x128xf32>
      %c0_24 = arith.constant 0 : index
      %c0_25 = arith.constant 0 : index
      %31 = vector.load %arg8[%c0_24, %c0_25] : memref<1x128xf32, #tpu.memory_space<vmem>>, vector<1x128xf32>
      %32 = vector.broadcast %31 : vector<1x128xf32> to vector<8x128xf32>
      %33 = arith.addf %30, %32 : vector<8x128xf32>
      %34 = math.absf %33 : vector<8x128xf32>
      %cst_26 = arith.constant 0.000000e+00 : f32
      %35 = vector.broadcast %cst_26 : f32 to vector<8x128xf32>
      %36 = arith.subf %35, %34 : vector<8x128xf32>
      %37 = math.exp %36 : vector<8x128xf32>
      %cst_27 = arith.constant 1.000000e+00 : f32
      %38 = vector.broadcast %cst_27 : f32 to vector<8x128xf32>
      %39 = arith.addf %38, %37 : vector<8x128xf32>
      %40 = tpu.reciprocal %39 {approx = true} : vector<8x128xf32> -> vector<8x128xf32>
      %cst_28 = arith.constant 0.000000e+00 : f32
      %41 = vector.broadcast %cst_28 : f32 to vector<8x128xf32>
      %42 = arith.cmpf oge, %33, %41 : vector<8x128xf32>
      %43 = arith.mulf %37, %40 : vector<8x128xf32>
      %44 = arith.select %42, %40, %43 : vector<8x128xi1>, vector<8x128xf32>
      %c0_29 = arith.constant 0 : index
      %c0_30 = arith.constant 0 : index
      %45 = vector.load %arg9[%c0_29, %c0_30] : memref<8x128xf32, #tpu.memory_space<vmem>>, vector<8x128xf32>
      tpu.vector_store %arg9[%c0_29, %c0_30], %44 {strides = array<i32>} : memref<8x128xf32, #tpu.memory_space<vmem>>, vector<8x128xf32>,
    } else {
    }
    return
  }
  func.func @transform_0(%arg0: i32, %arg1: i32) -> (i32, i32) {
    %c0_i32 = arith.constant 0 : i32
    return %arg0, %arg1 : i32, i32
  }
  func.func @transform_1(%arg0: i32, %arg1: i32) -> (i32, i32) {
    %c0_i32 = arith.constant 0 : i32
    %c0_i32_0 = arith.constant 0 : i32
    %c0_i32_1 = arith.constant 0 : i32
    return %c0_i32, %c0_i32_0 : i32, i32
  }
  func.func @transform_2(%arg0: i32, %arg1: i32) -> (i32, i32) {
    %c0_i32 = arith.constant 0 : i32
    %c0_i32_0 = arith.constant 0 : i32
    %c0_i32_1 = arith.constant 0 : i32
    return %c0_i32, %c0_i32_0 : i32, i32
  }
  func.func @transform_3(%arg0: i32, %arg1: i32) -> (i32, i32) {
    %c0_i32 = arith.constant 0 : i32
    %c0_i32_0 = arith.constant 0 : i32
    %c0_i32_1 = arith.constant 0 : i32
    return %c0_i32, %c0_i32_0 : i32, i32
  }
  func.func @transform_4(%arg0: i32, %arg1: i32) -> (i32, i32) {
    %c0_i32 = arith.constant 0 : i32
    %c0_i32_0 = arith.constant 0 : i32
    %c0_i32_1 = arith.constant 0 : i32
    return %c0_i32, %c0_i32_0 : i32, i32
  }
  func.func @transform_5(%arg0: i32, %arg1: i32) -> (i32, i32) {
    %c0_i32 = arith.constant 0 : i32
    %c0_i32_0 = arith.constant 0 : i32
    %c0_i32_1 = arith.constant 0 : i32
    return %c0_i32, %c0_i32_0 : i32, i32
  }
  func.func @transform_6(%arg0: i32, %arg1: i32) -> (i32, i32) {
    %c0_i32 = arith.constant 0 : i32
    %c0_i32_0 = arith.constant 0 : i32
    %c0_i32_1 = arith.constant 0 : i32
    return %c0_i32, %c0_i32_0 : i32, i32
  }
  func.func @transform_7(%arg0: i32, %arg1: i32) -> (i32, i32) {
    %c0_i32 = arith.constant 0 : i32
    %c0_i32_0 = arith.constant 0 : i32
    return %arg0, %c0_i32 : i32, i32
  }
}

</mosaic_0001>

<llo_original>
// kernel: discriminator_forward.1
$region0: #{discriminator_forward.1}
  #allocation0 [shape = 'u32[]', space=smem, size = 0x4, offset = 0x4, fixed_abs, tag = 'smem constant byte address 0x4 - core index']
  #allocation1 [shape = 'u32[144,128]{1,0:T(1,128)}', space=vmem, size = 0x12000, scoped, tag = 'internal scratch']
  #allocation2 [shape = 'f32[8,512]{1,0:T(8,128)}', space=vmem, size = 0x4000, scoped, tag = 'scratch operand']
  %s0 = inlined_call_operand.vmem [shape: bf16[8,256], index: 0, kind: input, shape index: {}]
  %s1 = inlined_call_operand.vmem [shape: bf16[256,512], index: 1, kind: input, shape index: {}]
  %s2 = inlined_call_operand.vmem [shape: f32[1,512], index: 2, kind: input, shape index: {}]
  %s3 = inlined_call_operand.vmem [shape: bf16[512,256], index: 3, kind: input, shape index: {}]
  %s4 = inlined_call_operand.vmem [shape: f32[1,256], index: 4, kind: input, shape index: {}]
  %s5 = inlined_call_operand.vmem [shape: bf16[256,128], index: 5, kind: input, shape index: {}]
  %s6 = inlined_call_operand.vmem [shape: f32[1,128], index: 6, kind: input, shape index: {}]
  %s7 = inlined_call_operand.vmem [shape: f32[8,128], index: 7, kind: output, shape index: {}]
  %s8 = sld [smem:[#allocation0]]
  $region46: #{discriminator_forward.1} parent=0
    _
  %s10 = ssub.s32 1, %s8
  %s11 = scalar_select 0, %s10, %s8
  // Predicated region
  $region2: #{discriminator_forward.1} parent=0 // pred_check
    _
  $region3: #{discriminator_forward.1} parent=0 // pred_check_branch
    %13 = sbr.rel (0) target = $region5
  $region4: #{discriminator_forward.1} parent=0 // pred_region
    _
  $region5: #{discriminator_forward.1} parent=0 // pred_fallthru
    _
  // Predicated region
  $region6: #{discriminator_forward.1} parent=0 // pred_check
    _
  $region7: #{discriminator_forward.1} parent=0 // pred_check_branch
    %15 = sbr.rel (0) target = $region9
  $region8: #{discriminator_forward.1} parent=0 // pred_region
    _
  $region9: #{discriminator_forward.1} parent=0 // pred_fallthru
    _
  // Predicated region
  $region10: #{discriminator_forward.1} parent=0 // pred_check
    _
  $region11: #{discriminator_forward.1} parent=0 // pred_check_branch
    %17 = sbr.rel (0) target = $region13
  $region12: #{discriminator_forward.1} parent=0 // pred_region
    _
  $region13: #{discriminator_forward.1} parent=0 // pred_fallthru
    _
  // Predicated region
  $region14: #{discriminator_forward.1} parent=0 // pred_check
    _
  $region15: #{discriminator_forward.1} parent=0 // pred_check_branch
    %19 = sbr.rel (0) target = $region17
  $region16: #{discriminator_forward.1} parent=0 // pred_region
    _
  $region17: #{discriminator_forward.1} parent=0 // pred_fallthru
    _
  // Predicated region
  $region18: #{discriminator_forward.1} parent=0 // pred_check
    _
  $region19: #{discriminator_forward.1} parent=0 // pred_check_branch
    %21 = sbr.rel (0) target = $region21
  $region20: #{discriminator_forward.1} parent=0 // pred_region
    _
  $region21: #{discriminator_forward.1} parent=0 // pred_fallthru
    _
  // Predicated region
  $region22: #{discriminator_forward.1} parent=0 // pred_check
    _
  $region23: #{discriminator_forward.1} parent=0 // pred_check_branch
    %23 = sbr.rel (0) target = $region25
  $region24: #{discriminator_forward.1} parent=0 // pred_region
    _
  $region25: #{discriminator_forward.1} parent=0 // pred_fallthru
    _
  // Predicated region
  $region26: #{discriminator_forward.1} parent=0 // pred_check
    _
  $region27: #{discriminator_forward.1} parent=0 // pred_check_branch
    %25 = sbr.rel (0) target = $region29
  $region28: #{discriminator_forward.1} parent=0 // pred_region
    _
  $region29: #{discriminator_forward.1} parent=0 // pred_fallthru
    _
  %p27 = scmp.eq.s32.totalorder 0, 0
  // Predicated region
  $region30: #{discriminator_forward.1} parent=0 // pred_check
    %p28 = pneg %p27
  $region31: #{discriminator_forward.1} parent=0 // pred_check_branch
    %30 = sbr.rel (%p28) target = $region33
  $region32: #{discriminator_forward.1} parent=0 // pred_region
    %31 = vst [vmem:[#allocation2] sm:$0xff] 0.0
    %32 = vst [vmem:[#allocation2 + $0x8] sm:$0xff] 0.0
    %33 = vst [vmem:[#allocation2 + $0x10] sm:$0xff] 0.0
    %34 = vst [vmem:[#allocation2 + $0x18] sm:$0xff] 0.0
  $region33: #{discriminator_forward.1} parent=0 // pred_fallthru
    _
  %v35 = vld [vmem:[#allocation2] sm:$0xff]
  %v36 = vld [vmem:[#allocation2 + $0x8] sm:$0xff]
  %v37 = vld [vmem:[#allocation2 + $0x10] sm:$0xff]
  %v38 = vld [vmem:[#allocation2 + $0x18] sm:$0xff]
  %v39 = vld [vmem:[%s0] sm:$0xff]
  %v40 = vld [vmem:[%s1] sm:$0xff]
  %v41 = vld [vmem:[%s1 + $0x8] sm:$0xff]
  %v42 = vld [vmem:[%s1 + $0x10] sm:$0xff]
  %v43 = vld [vmem:[%s1 + $0x18] sm:$0xff]
  %v44 = vld [vmem:[%s1 + $0x20] sm:$0xff]
  %v45 = vld [vmem:[%s1 + $0x28] sm:$0xff]
  %v46 = vld [vmem:[%s1 + $0x30] sm:$0xff]
  %v47 = vld [vmem:[%s1 + $0x38] sm:$0xff]
  %v48 = vld [vmem:[%s1 + $0x40] sm:$0xff]
  %v49 = vld [vmem:[%s1 + $0x48] sm:$0xff]
  %v50 = vld [vmem:[%s1 + $0x50] sm:$0xff]
  %v51 = vld [vmem:[%s1 + $0x58] sm:$0xff]
  %v52 = vld [vmem:[%s1 + $0x60] sm:$0xff]
  %v53 = vld [vmem:[%s1 + $0x68] sm:$0xff]
  %v54 = vld [vmem:[%s1 + $0x70] sm:$0xff]
  %v55 = vld [vmem:[%s1 + $0x78] sm:$0xff]
  %v56 = vld [vmem:[%s1 + $0x80] sm:$0xff]
  %v57 = vld [vmem:[%s1 + $0x88] sm:$0xff]
  %v58 = vld [vmem:[%s1 + $0x90] sm:$0xff]
  %v59 = vld [vmem:[%s1 + $0x98] sm:$0xff]
  %v60 = vld [vmem:[%s1 + $0xa0] sm:$0xff]
  %v61 = vld [vmem:[%s1 + $0xa8] sm:$0xff]
  %v62 = vld [vmem:[%s1 + $0xb0] sm:$0xff]
  %v63 = vld [vmem:[%s1 + $0xb8] sm:$0xff]
  %v64 = vld [vmem:[%s1 + $0xc0] sm:$0xff]
  %v65 = vld [vmem:[%s1 + $0xc8] sm:$0xff]
  %v66 = vld [vmem:[%s1 + $0xd0] sm:$0xff]
  %v67 = vld [vmem:[%s1 + $0xd8] sm:$0xff]
  %v68 = vld [vmem:[%s1 + $0xe0] sm:$0xff]
  %v69 = vld [vmem:[%s1 + $0xe8] sm:$0xff]
  %v70 = vld [vmem:[%s1 + $0xf0] sm:$0xff]
  %v71 = vld [vmem:[%s1 + $0xf8] sm:$0xff]
  %v72 = vld [vmem:[%s1 + $0x100] sm:$0xff]
  %v73 = vld [vmem:[%s1 + $0x108] sm:$0xff]
  %v74 = vld [vmem:[%s1 + $0x110] sm:$0xff]
  %v75 = vld [vmem:[%s1 + $0x118] sm:$0xff]
  %v76 = vld [vmem:[%s1 + $0x120] sm:$0xff]
  %v77 = vld [vmem:[%s1 + $0x128] sm:$0xff]
  %v78 = vld [vmem:[%s1 + $0x130] sm:$0xff]
  %v79 = vld [vmem:[%s1 + $0x138] sm:$0xff]
  %v80 = vld [vmem:[%s1 + $0x140] sm:$0xff]
  %v81 = vld [vmem:[%s1 + $0x148] sm:$0xff]
  %v82 = vld [vmem:[%s1 + $0x150] sm:$0xff]
  %v83 = vld [vmem:[%s1 + $0x158] sm:$0xff]
  %v84 = vld [vmem:[%s1 + $0x160] sm:$0xff]
  %v85 = vld [vmem:[%s1 + $0x168] sm:$0xff]
  %v86 = vld [vmem:[%s1 + $0x170] sm:$0xff]
  %v87 = vld [vmem:[%s1 + $0x178] sm:$0xff]
  %v88 = vld [vmem:[%s1 + $0x180] sm:$0xff]
  %v89 = vld [vmem:[%s1 + $0x188] sm:$0xff]
  %v90 = vld [vmem:[%s1 + $0x190] sm:$0xff]
  %v91 = vld [vmem:[%s1 + $0x198] sm:$0xff]
  %v92 = vld [vmem:[%s1 + $0x1a0] sm:$0xff]
  %v93 = vld [vmem:[%s1 + $0x1a8] sm:$0xff]
  %v94 = vld [vmem:[%s1 + $0x1b0] sm:$0xff]
  %v95 = vld [vmem:[%s1 + $0x1b8] sm:$0xff]
  %v96 = vld [vmem:[%s1 + $0x1c0] sm:$0xff]
  %v97 = vld [vmem:[%s1 + $0x1c8] sm:$0xff]
  %v98 = vld [vmem:[%s1 + $0x1d0] sm:$0xff]
  %v99 = vld [vmem:[%s1 + $0x1d8] sm:$0xff]
  %v100 = vld [vmem:[%s1 + $0x1e0] sm:$0xff]
  %v101 = vld [vmem:[%s1 + $0x1e8] sm:$0xff]
  %v102 = vld [vmem:[%s1 + $0x1f0] sm:$0xff]
  %v103 = vld [vmem:[%s1 + $0x1f8] sm:$0xff]
  %v105 = vunpack.c.l.b16 %v39
  %v106 = vunpack.c.h.b16 %v39
  %v107 = vpack.c.b16 %v105, %v105
  %v108 = vpack.c.b16 %v106, %v106
  %v175 = vunpack.c.l.b16 %v40
  %v176 = vunpack.c.h.b16 %v40
  %v177 = vunpack.c.l.b16 %v41
  %v178 = vunpack.c.h.b16 %v41
  %v179 = vunpack.c.l.b16 %v42
  %v180 = vunpack.c.h.b16 %v42
  %v181 = vunpack.c.l.b16 %v43
  %v182 = vunpack.c.h.b16 %v43
  %v183 = vunpack.c.l.b16 %v44
  %v184 = vunpack.c.h.b16 %v44
  %v185 = vunpack.c.l.b16 %v45
  %v186 = vunpack.c.h.b16 %v45
  %v187 = vunpack.c.l.b16 %v46
  %v188 = vunpack.c.h.b16 %v46
  %v189 = vunpack.c.l.b16 %v47
  %v190 = vunpack.c.h.b16 %v47
  %v191 = vunpack.c.l.b16 %v48
  %v192 = vunpack.c.h.b16 %v48
  %v193 = vunpack.c.l.b16 %v49
  %v194 = vunpack.c.h.b16 %v49
  %v195 = vunpack.c.l.b16 %v50
  %v196 = vunpack.c.h.b16 %v50
  %v197 = vunpack.c.l.b16 %v51
  %v198 = vunpack.c.h.b16 %v51
  %v199 = vunpack.c.l.b16 %v52
  %v200 = vunpack.c.h.b16 %v52
  %v201 = vunpack.c.l.b16 %v53
  %v202 = vunpack.c.h.b16 %v53
  %v203 = vunpack.c.l.b16 %v54
  %v204 = vunpack.c.h.b16 %v54
  %v205 = vunpack.c.l.b16 %v55
  %v206 = vunpack.c.h.b16 %v55
  %v207 = vunpack.c.l.b16 %v56
  %v208 = vunpack.c.h.b16 %v56
  %v209 = vunpack.c.l.b16 %v57
  %v210 = vunpack.c.h.b16 %v57
  %v211 = vunpack.c.l.b16 %v58
  %v212 = vunpack.c.h.b16 %v58
  %v213 = vunpack.c.l.b16 %v59
  %v214 = vunpack.c.h.b16 %v59
  %v215 = vunpack.c.l.b16 %v60
  %v216 = vunpack.c.h.b16 %v60
  %v217 = vunpack.c.l.b16 %v61
  %v218 = vunpack.c.h.b16 %v61
  %v219 = vunpack.c.l.b16 %v62
  %v220 = vunpack.c.h.b16 %v62
  %v221 = vunpack.c.l.b16 %v63
  %v222 = vunpack.c.h.b16 %v63
  %v223 = vunpack.c.l.b16 %v64
  %v224 = vunpack.c.h.b16 %v64
  %v225 = vunpack.c.l.b16 %v65
  %v226 = vunpack.c.h.b16 %v65
  %v227 = vunpack.c.l.b16 %v66
  %v228 = vunpack.c.h.b16 %v66
  %v229 = vunpack.c.l.b16 %v67
  %v230 = vunpack.c.h.b16 %v67
  %v231 = vunpack.c.l.b16 %v68
  %v232 = vunpack.c.h.b16 %v68
  %v233 = vunpack.c.l.b16 %v69
  %v234 = vunpack.c.h.b16 %v69
  %v235 = vunpack.c.l.b16 %v70
  %v236 = vunpack.c.h.b16 %v70
  %v237 = vunpack.c.l.b16 %v71
  %v238 = vunpack.c.h.b16 %v71
  %v239 = vunpack.c.l.b16 %v72
  %v240 = vunpack.c.h.b16 %v72
  %v241 = vunpack.c.l.b16 %v73
  %v242 = vunpack.c.h.b16 %v73
  %v243 = vunpack.c.l.b16 %v74
  %v244 = vunpack.c.h.b16 %v74
  %v245 = vunpack.c.l.b16 %v75
  %v246 = vunpack.c.h.b16 %v75
  %v247 = vunpack.c.l.b16 %v76
  %v248 = vunpack.c.h.b16 %v76
  %v249 = vunpack.c.l.b16 %v77
  %v250 = vunpack.c.h.b16 %v77
  %v251 = vunpack.c.l.b16 %v78
  %v252 = vunpack.c.h.b16 %v78
  %v253 = vunpack.c.l.b16 %v79
  %v254 = vunpack.c.h.b16 %v79
  %v255 = vunpack.c.l.b16 %v80
  %v256 = vunpack.c.h.b16 %v80
  %v257 = vunpack.c.l.b16 %v81
  %v258 = vunpack.c.h.b16 %v81
  %v259 = vunpack.c.l.b16 %v82
  %v260 = vunpack.c.h.b16 %v82
  %v261 = vunpack.c.l.b16 %v83
  %v262 = vunpack.c.h.b16 %v83
  %v263 = vunpack.c.l.b16 %v84
  %v264 = vunpack.c.h.b16 %v84
  %v265 = vunpack.c.l.b16 %v85
  %v266 = vunpack.c.h.b16 %v85
  %v267 = vunpack.c.l.b16 %v86
  %v268 = vunpack.c.h.b16 %v86
  %v269 = vunpack.c.l.b16 %v87
  %v270 = vunpack.c.h.b16 %v87
  %v271 = vunpack.c.l.b16 %v88
  %v272 = vunpack.c.h.b16 %v88
  %v273 = vunpack.c.l.b16 %v89
  %v274 = vunpack.c.h.b16 %v89
  %v275 = vunpack.c.l.b16 %v90
  %v276 = vunpack.c.h.b16 %v90
  %v277 = vunpack.c.l.b16 %v91
  %v278 = vunpack.c.h.b16 %v91
  %v279 = vunpack.c.l.b16 %v92
  %v280 = vunpack.c.h.b16 %v92
  %v281 = vunpack.c.l.b16 %v93
  %v282 = vunpack.c.h.b16 %v93
  %v283 = vunpack.c.l.b16 %v94
  %v284 = vunpack.c.h.b16 %v94
  %v285 = vunpack.c.l.b16 %v95
  %v286 = vunpack.c.h.b16 %v95
  %v287 = vunpack.c.l.b16 %v96
  %v288 = vunpack.c.h.b16 %v96
  %v289 = vunpack.c.l.b16 %v97
  %v290 = vunpack.c.h.b16 %v97
  %v291 = vunpack.c.l.b16 %v98
  %v292 = vunpack.c.h.b16 %v98
  %v293 = vunpack.c.l.b16 %v99
  %v294 = vunpack.c.h.b16 %v99
  %v295 = vunpack.c.l.b16 %v100
  %v296 = vunpack.c.h.b16 %v100
  %v297 = vunpack.c.l.b16 %v101
  %v298 = vunpack.c.h.b16 %v101
  %v299 = vunpack.c.l.b16 %v102
  %v300 = vunpack.c.h.b16 %v102
  %v301 = vunpack.c.l.b16 %v103
  %v302 = vunpack.c.h.b16 %v103
  %v303 = vpack.c.b16 %v179, %v175
  %v304 = vpack.c.b16 %v180, %v176
  %v305 = vpack.c.b16 %v181, %v177
  %v306 = vpack.c.b16 %v182, %v178
  %v307 = vpack.c.b16 %v187, %v183
  %v308 = vpack.c.b16 %v188, %v184
  %v309 = vpack.c.b16 %v189, %v185
  %v310 = vpack.c.b16 %v190, %v186
  %v311 = vpack.c.b16 %v195, %v191
  %v312 = vpack.c.b16 %v196, %v192
  %v313 = vpack.c.b16 %v197, %v193
  %v314 = vpack.c.b16 %v198, %v194
  %v315 = vpack.c.b16 %v203, %v199
  %v316 = vpack.c.b16 %v204, %v200
  %v317 = vpack.c.b16 %v205, %v201
  %v318 = vpack.c.b16 %v206, %v202
  %v319 = vpack.c.b16 %v211, %v207
  %v320 = vpack.c.b16 %v212, %v208
  %v321 = vpack.c.b16 %v213, %v209
  %v322 = vpack.c.b16 %v214, %v210
  %v323 = vpack.c.b16 %v219, %v215
  %v324 = vpack.c.b16 %v220, %v216
  %v325 = vpack.c.b16 %v221, %v217
  %v326 = vpack.c.b16 %v222, %v218
  %v327 = vpack.c.b16 %v227, %v223
  %v328 = vpack.c.b16 %v228, %v224
  %v329 = vpack.c.b16 %v229, %v225
  %v330 = vpack.c.b16 %v230, %v226
  %v331 = vpack.c.b16 %v235, %v231
  %v332 = vpack.c.b16 %v236, %v232
  %v333 = vpack.c.b16 %v237, %v233
  %v334 = vpack.c.b16 %v238, %v234
  %v335 = vpack.c.b16 %v243, %v239
  %v336 = vpack.c.b16 %v244, %v240
  %v337 = vpack.c.b16 %v245, %v241
  %v338 = vpack.c.b16 %v246, %v242
  %v339 = vpack.c.b16 %v251, %v247
  %v340 = vpack.c.b16 %v252, %v248
  %v341 = vpack.c.b16 %v253, %v249
  %v342 = vpack.c.b16 %v254, %v250
  %v343 = vpack.c.b16 %v259, %v255
  %v344 = vpack.c.b16 %v260, %v256
  %v345 = vpack.c.b16 %v261, %v257
  %v346 = vpack.c.b16 %v262, %v258
  %v347 = vpack.c.b16 %v267, %v263
  %v348 = vpack.c.b16 %v268, %v264
  %v349 = vpack.c.b16 %v269, %v265
  %v350 = vpack.c.b16 %v270, %v266
  %v351 = vpack.c.b16 %v275, %v271
  %v352 = vpack.c.b16 %v276, %v272
  %v353 = vpack.c.b16 %v277, %v273
  %v354 = vpack.c.b16 %v278, %v274
  %v355 = vpack.c.b16 %v283, %v279
  %v356 = vpack.c.b16 %v284, %v280
  %v357 = vpack.c.b16 %v285, %v281
  %v358 = vpack.c.b16 %v286, %v282
  %v359 = vpack.c.b16 %v291, %v287
  %v360 = vpack.c.b16 %v292, %v288
  %v361 = vpack.c.b16 %v293, %v289
  %v362 = vpack.c.b16 %v294, %v290
  %v363 = vpack.c.b16 %v299, %v295
  %v364 = vpack.c.b16 %v300, %v296
  %v365 = vpack.c.b16 %v301, %v297
  %v366 = vpack.c.b16 %v302, %v298
  %431 = vmatprep.subr.bf16.mxu0 %v332
  %432 = vmatpush1.bf16.msra.mxu0 %v331
  %433 = vmatprep.subr.bf16.mxu0 %v328
  %434 = vmatpush1.bf16.msra.mxu0 %v327
  %435 = vmatprep.subr.bf16.mxu0 %v324
  %436 = vmatpush1.bf16.msra.mxu0 %v323
  %437 = vmatprep.subr.bf16.mxu0 %v320
  %438 = vmatpush1.bf16.msra.mxu0 %v319
  %439 = vmatprep.subr.bf16.mxu0 %v316
  %440 = vmatpush1.bf16.msra.mxu0 %v315
  %441 = vmatprep.subr.bf16.mxu0 %v312
  %442 = vmatpush1.bf16.msra.mxu0 %v311
  %443 = vmatprep.subr.bf16.mxu0 %v308
  %444 = vmatpush1.bf16.msra.mxu0 %v307
  %445 = vmatprep.subr.bf16.mxu0 %v304
  %446 = vmatpush1.bf16.msra.mxu0 %v303
  %447 = vmatprep.subr.bf16.mxu0 %v364
  %448 = vmatpush2.bf16.msra.mxu0 %v363
  %449 = vmatprep.subr.bf16.mxu0 %v360
  %450 = vmatpush2.bf16.msra.mxu0 %v359
  %451 = vmatprep.subr.bf16.mxu0 %v356
  %452 = vmatpush2.bf16.msra.mxu0 %v355
  %453 = vmatprep.subr.bf16.mxu0 %v352
  %454 = vmatpush2.bf16.msra.mxu0 %v351
  %455 = vmatprep.subr.bf16.mxu0 %v348
  %456 = vmatpush2.bf16.msra.mxu0 %v347
  %457 = vmatprep.subr.bf16.mxu0 %v344
  %458 = vmatpush2.bf16.msra.mxu0 %v343
  %459 = vmatprep.subr.bf16.mxu0 %v340
  %460 = vmatpush2.bf16.msra.mxu0 %v339
  %461 = vmatprep.subr.bf16.mxu0 %v336
  %462 = vmatpush2.bf16.msra.mxu0 %v335
  %463 = vmatprep.mubr.bf16.mxu0 %v108
  %464 = vmatmul.mubr.bf16.gmra.mxu0 %v107
  %v465 = vpop.f32.mrf.mxu0
  %v466 = vadd.f32 0.0, %v465
  %v467 = vpop.f32.mrf.mxu0
  %v468 = vadd.f32 0.0, %v467
  %v469 = vpop.f32.mrf.mxu0
  %v470 = vpop.f32.mrf.mxu0
  %471 = vdwg.mxu0
  %472 = vmatprep.subr.bf16.mxu0 %v334
  %473 = vmatpush1.bf16.msra.mxu0 %v333
  %474 = vmatprep.subr.bf16.mxu0 %v330
  %475 = vmatpush1.bf16.msra.mxu0 %v329
  %476 = vmatprep.subr.bf16.mxu0 %v326
  %477 = vmatpush1.bf16.msra.mxu0 %v325
  %478 = vmatprep.subr.bf16.mxu0 %v322
  %479 = vmatpush1.bf16.msra.mxu0 %v321
  %480 = vmatprep.subr.bf16.mxu0 %v318
  %481 = vmatpush1.bf16.msra.mxu0 %v317
  %482 = vmatprep.subr.bf16.mxu0 %v314
  %483 = vmatpush1.bf16.msra.mxu0 %v313
  %484 = vmatprep.subr.bf16.mxu0 %v310
  %485 = vmatpush1.bf16.msra.mxu0 %v309
  %486 = vmatprep.subr.bf16.mxu0 %v306
  %487 = vmatpush1.bf16.msra.mxu0 %v305
  %488 = vmatprep.subr.bf16.mxu0 %v366
  %489 = vmatpush2.bf16.msra.mxu0 %v365
  %490 = vmatprep.subr.bf16.mxu0 %v362
  %491 = vmatpush2.bf16.msra.mxu0 %v361
  %492 = vmatprep.subr.bf16.mxu0 %v358
  %493 = vmatpush2.bf16.msra.mxu0 %v357
  %494 = vmatprep.subr.bf16.mxu0 %v354
  %495 = vmatpush2.bf16.msra.mxu0 %v353
  %496 = vmatprep.subr.bf16.mxu0 %v350
  %497 = vmatpush2.bf16.msra.mxu0 %v349
  %498 = vmatprep.subr.bf16.mxu0 %v346
  %499 = vmatpush2.bf16.msra.mxu0 %v345
  %500 = vmatprep.subr.bf16.mxu0 %v342
  %501 = vmatpush2.bf16.msra.mxu0 %v341
  %502 = vmatprep.subr.bf16.mxu0 %v338
  %503 = vmatpush2.bf16.msra.mxu0 %v337
  %504 = vmatprep.mubr.bf16.mxu0 %v108
  %505 = vmatmul.mubr.bf16.gmra.mxu0 %v107
  %v506 = vpop.f32.mrf.mxu0
  %v507 = vadd.f32 0.0, %v506
  %v508 = vpop.f32.mrf.mxu0
  %v509 = vadd.f32 0.0, %v508
  %v510 = vpop.f32.mrf.mxu0
  %v511 = vpop.f32.mrf.mxu0
  %512 = vdwg.mxu0
  %v513 = vadd.f32 %v35, %v466
  %v514 = vadd.f32 %v36, %v468
  %v515 = vadd.f32 %v37, %v507
  %v516 = vadd.f32 %v38, %v509
  %517 = vst [vmem:[#allocation2] sm:$0xff] %v513
  %518 = vst [vmem:[#allocation2 + $0x8] sm:$0xff] %v514
  %519 = vst [vmem:[#allocation2 + $0x10] sm:$0xff] %v515
  %520 = vst [vmem:[#allocation2 + $0x18] sm:$0xff] %v516
  // Predicated region
  $region34: #{discriminator_forward.1} parent=0 // pred_check
    %p521 = pneg %p27
  $region35: #{discriminator_forward.1} parent=0 // pred_check_branch
    %523 = sbr.rel (%p521) target = $region37
  $region36: #{discriminator_forward.1} parent=0 // pred_region
    %v524 = vld [vmem:[#allocation2] sm:$0xff]
    %v525 = vld [vmem:[#allocation2 + $0x8] sm:$0xff]
    %v526 = vld [vmem:[#allocation2 + $0x10] sm:$0xff]
    %v527 = vld [vmem:[#allocation2 + $0x18] sm:$0xff]
    %v528 = vld [vmem:[%s2] sm:$0xf]
    %v530 = vlaneseq
    %v531 = vshrl.u32 %v530, 7
    %v532 = vsub.s32 0, %v531
    %v533 = vrot.slane %v528, %v532
    %v534 = vlaneseq
    %v535 = vshrl.u32 %v534, 7
    %v536 = vsub.s32 1, %v535
    %v537 = vrot.slane %v528, %v536
    %v538 = vlaneseq
    %v539 = vshrl.u32 %v538, 7
    %v540 = vsub.s32 2, %v539
    %v541 = vrot.slane %v528, %v540
    %v542 = vlaneseq
    %v543 = vshrl.u32 %v542, 7
    %v544 = vsub.s32 3, %v543
    %v545 = vrot.slane %v528, %v544
    %v550 = vadd.f32 %v524, %v533
    %v551 = vadd.f32 %v525, %v537
    %v552 = vadd.f32 %v526, %v541
    %v553 = vadd.f32 %v527, %v545
    %v554 = vmul.f32 %v550, 0.2
    %v555 = vmul.f32 %v551, 0.2
    %v556 = vmul.f32 %v552, 0.2
    %v557 = vmul.f32 %v553, 0.2
    %v558 = vmax.f32 %v550, %v554
    %v559 = vmax.f32 %v551, %v555
    %v560 = vmax.f32 %v552, %v556
    %v561 = vmax.f32 %v553, %v557
    %v562 = vpack.c.bf16 %v558, %v558
    %v563 = vpack.c.bf16 %v559, %v559
    %v564 = vpack.c.bf16 %v560, %v560
    %v565 = vpack.c.bf16 %v561, %v561
    %v566 = vld [vmem:[%s3] sm:$0xff]
    %v567 = vld [vmem:[%s3 + $0x8] sm:$0xff]
    %v568 = vld [vmem:[%s3 + $0x10] sm:$0xff]
    %v569 = vld [vmem:[%s3 + $0x18] sm:$0xff]
    %v570 = vld [vmem:[%s3 + $0x20] sm:$0xff]
    %v571 = vld [vmem:[%s3 + $0x28] sm:$0xff]
    %v572 = vld [vmem:[%s3 + $0x30] sm:$0xff]
    %v573 = vld [vmem:[%s3 + $0x38] sm:$0xff]
    %v574 = vld [vmem:[%s3 + $0x40] sm:$0xff]
    %v575 = vld [vmem:[%s3 + $0x48] sm:$0xff]
    %v576 = vld [vmem:[%s3 + $0x50] sm:$0xff]
    %v577 = vld [vmem:[%s3 + $0x58] sm:$0xff]
    %v578 = vld [vmem:[%s3 + $0x60] sm:$0xff]
    %v579 = vld [vmem:[%s3 + $0x68] sm:$0xff]
    %v580 = vld [vmem:[%s3 + $0x70] sm:$0xff]
    %v581 = vld [vmem:[%s3 + $0x78] sm:$0xff]
    %v582 = vld [vmem:[%s3 + $0x80] sm:$0xff]
    %v583 = vld [vmem:[%s3 + $0x88] sm:$0xff]
    %v584 = vld [vmem:[%s3 + $0x90] sm:$0xff]
    %v585 = vld [vmem:[%s3 + $0x98] sm:$0xff]
    %v586 = vld [vmem:[%s3 + $0xa0] sm:$0xff]
    %v587 = vld [vmem:[%s3 + $0xa8] sm:$0xff]
    %v588 = vld [vmem:[%s3 + $0xb0] sm:$0xff]
    %v589 = vld [vmem:[%s3 + $0xb8] sm:$0xff]
    %v590 = vld [vmem:[%s3 + $0xc0] sm:$0xff]
    %v591 = vld [vmem:[%s3 + $0xc8] sm:$0xff]
    %v592 = vld [vmem:[%s3 + $0xd0] sm:$0xff]
    %v593 = vld [vmem:[%s3 + $0xd8] sm:$0xff]
    %v594 = vld [vmem:[%s3 + $0xe0] sm:$0xff]
    %v595 = vld [vmem:[%s3 + $0xe8] sm:$0xff]
    %v596 = vld [vmem:[%s3 + $0xf0] sm:$0xff]
    %v597 = vld [vmem:[%s3 + $0xf8] sm:$0xff]
    %v598 = vld [vmem:[%s3 + $0x100] sm:$0xff]
    %v599 = vld [vmem:[%s3 + $0x108] sm:$0xff]
    %v600 = vld [vmem:[%s3 + $0x110] sm:$0xff]
    %v601 = vld [vmem:[%s3 + $0x118] sm:$0xff]
    %v602 = vld [vmem:[%s3 + $0x120] sm:$0xff]
    %v603 = vld [vmem:[%s3 + $0x128] sm:$0xff]
    %v604 = vld [vmem:[%s3 + $0x130] sm:$0xff]
    %v605 = vld [vmem:[%s3 + $0x138] sm:$0xff]
    %v606 = vld [vmem:[%s3 + $0x140] sm:$0xff]
    %v607 = vld [vmem:[%s3 + $0x148] sm:$0xff]
    %v608 = vld [vmem:[%s3 + $0x150] sm:$0xff]
    %v609 = vld [vmem:[%s3 + $0x158] sm:$0xff]
    %v610 = vld [vmem:[%s3 + $0x160] sm:$0xff]
    %v611 = vld [vmem:[%s3 + $0x168] sm:$0xff]
    %v612 = vld [vmem:[%s3 + $0x170] sm:$0xff]
    %v613 = vld [vmem:[%s3 + $0x178] sm:$0xff]
    %v614 = vld [vmem:[%s3 + $0x180] sm:$0xff]
    %v615 = vld [vmem:[%s3 + $0x188] sm:$0xff]
    %v616 = vld [vmem:[%s3 + $0x190] sm:$0xff]
    %v617 = vld [vmem:[%s3 + $0x198] sm:$0xff]
    %v618 = vld [vmem:[%s3 + $0x1a0] sm:$0xff]
    %v619 = vld [vmem:[%s3 + $0x1a8] sm:$0xff]
    %v620 = vld [vmem:[%s3 + $0x1b0] sm:$0xff]
    %v621 = vld [vmem:[%s3 + $0x1b8] sm:$0xff]
    %v622 = vld [vmem:[%s3 + $0x1c0] sm:$0xff]
    %v623 = vld [vmem:[%s3 + $0x1c8] sm:$0xff]
    %v624 = vld [vmem:[%s3 + $0x1d0] sm:$0xff]
    %v625 = vld [vmem:[%s3 + $0x1d8] sm:$0xff]
    %v626 = vld [vmem:[%s3 + $0x1e0] sm:$0xff]
    %v627 = vld [vmem:[%s3 + $0x1e8] sm:$0xff]
    %v628 = vld [vmem:[%s3 + $0x1f0] sm:$0xff]
    %v629 = vld [vmem:[%s3 + $0x1f8] sm:$0xff]
    %v630 = vld [vmem:[%s4] sm:$0x3]
    %v632 = vlaneseq
    %v633 = vshrl.u32 %v632, 7
    %v634 = vsub.s32 0, %v633
    %v635 = vrot.slane %v630, %v634
    %v636 = vlaneseq
    %v637 = vshrl.u32 %v636, 7
    %v638 = vsub.s32 1, %v637
    %v639 = vrot.slane %v630, %v638
    %v706 = vunpack.c.l.b16 %v566
    %v707 = vunpack.c.h.b16 %v566
    %v708 = vunpack.c.l.b16 %v567
    %v709 = vunpack.c.h.b16 %v567
    %v710 = vunpack.c.l.b16 %v568
    %v711 = vunpack.c.h.b16 %v568
    %v712 = vunpack.c.l.b16 %v569
    %v713 = vunpack.c.h.b16 %v569
    %v714 = vunpack.c.l.b16 %v570
    %v715 = vunpack.c.h.b16 %v570
    %v716 = vunpack.c.l.b16 %v571
    %v717 = vunpack.c.h.b16 %v571
    %v718 = vunpack.c.l.b16 %v572
    %v719 = vunpack.c.h.b16 %v572
    %v720 = vunpack.c.l.b16 %v573
    %v721 = vunpack.c.h.b16 %v573
    %v722 = vunpack.c.l.b16 %v574
    %v723 = vunpack.c.h.b16 %v574
    %v724 = vunpack.c.l.b16 %v575
    %v725 = vunpack.c.h.b16 %v575
    %v726 = vunpack.c.l.b16 %v576
    %v727 = vunpack.c.h.b16 %v576
    %v728 = vunpack.c.l.b16 %v577
    %v729 = vunpack.c.h.b16 %v577
    %v730 = vunpack.c.l.b16 %v578
    %v731 = vunpack.c.h.b16 %v578
    %v732 = vunpack.c.l.b16 %v579
    %v733 = vunpack.c.h.b16 %v579
    %v734 = vunpack.c.l.b16 %v580
    %v735 = vunpack.c.h.b16 %v580
    %v736 = vunpack.c.l.b16 %v581
    %v737 = vunpack.c.h.b16 %v581
    %v738 = vunpack.c.l.b16 %v582
    %v739 = vunpack.c.h.b16 %v582
    %v740 = vunpack.c.l.b16 %v583
    %v741 = vunpack.c.h.b16 %v583
    %v742 = vunpack.c.l.b16 %v584
    %v743 = vunpack.c.h.b16 %v584
    %v744 = vunpack.c.l.b16 %v585
    %v745 = vunpack.c.h.b16 %v585
    %v746 = vunpack.c.l.b16 %v586
    %v747 = vunpack.c.h.b16 %v586
    %v748 = vunpack.c.l.b16 %v587
    %v749 = vunpack.c.h.b16 %v587
    %v750 = vunpack.c.l.b16 %v588
    %v751 = vunpack.c.h.b16 %v588
    %v752 = vunpack.c.l.b16 %v589
    %v753 = vunpack.c.h.b16 %v589
    %v754 = vunpack.c.l.b16 %v590
    %v755 = vunpack.c.h.b16 %v590
    %v756 = vunpack.c.l.b16 %v591
    %v757 = vunpack.c.h.b16 %v591
    %v758 = vunpack.c.l.b16 %v592
    %v759 = vunpack.c.h.b16 %v592
    %v760 = vunpack.c.l.b16 %v593
    %v761 = vunpack.c.h.b16 %v593
    %v762 = vunpack.c.l.b16 %v594
    %v763 = vunpack.c.h.b16 %v594
    %v764 = vunpack.c.l.b16 %v595
    %v765 = vunpack.c.h.b16 %v595
    %v766 = vunpack.c.l.b16 %v596
    %v767 = vunpack.c.h.b16 %v596
    %v768 = vunpack.c.l.b16 %v597
    %v769 = vunpack.c.h.b16 %v597
    %v770 = vunpack.c.l.b16 %v598
    %v771 = vunpack.c.h.b16 %v598
    %v772 = vunpack.c.l.b16 %v599
    %v773 = vunpack.c.h.b16 %v599
    %v774 = vunpack.c.l.b16 %v600
    %v775 = vunpack.c.h.b16 %v600
    %v776 = vunpack.c.l.b16 %v601
    %v777 = vunpack.c.h.b16 %v601
    %v778 = vunpack.c.l.b16 %v602
    %v779 = vunpack.c.h.b16 %v602
    %v780 = vunpack.c.l.b16 %v603
    %v781 = vunpack.c.h.b16 %v603
    %v782 = vunpack.c.l.b16 %v604
    %v783 = vunpack.c.h.b16 %v604
    %v784 = vunpack.c.l.b16 %v605
    %v785 = vunpack.c.h.b16 %v605
    %v786 = vunpack.c.l.b16 %v606
    %v787 = vunpack.c.h.b16 %v606
    %v788 = vunpack.c.l.b16 %v607
    %v789 = vunpack.c.h.b16 %v607
    %v790 = vunpack.c.l.b16 %v608
    %v791 = vunpack.c.h.b16 %v608
    %v792 = vunpack.c.l.b16 %v609
    %v793 = vunpack.c.h.b16 %v609
    %v794 = vunpack.c.l.b16 %v610
    %v795 = vunpack.c.h.b16 %v610
    %v796 = vunpack.c.l.b16 %v611
    %v797 = vunpack.c.h.b16 %v611
    %v798 = vunpack.c.l.b16 %v612
    %v799 = vunpack.c.h.b16 %v612
    %v800 = vunpack.c.l.b16 %v613
    %v801 = vunpack.c.h.b16 %v613
    %v802 = vunpack.c.l.b16 %v614
    %v803 = vunpack.c.h.b16 %v614
    %v804 = vunpack.c.l.b16 %v615
    %v805 = vunpack.c.h.b16 %v615
    %v806 = vunpack.c.l.b16 %v616
    %v807 = vunpack.c.h.b16 %v616
    %v808 = vunpack.c.l.b16 %v617
    %v809 = vunpack.c.h.b16 %v617
    %v810 = vunpack.c.l.b16 %v618
    %v811 = vunpack.c.h.b16 %v618
    %v812 = vunpack.c.l.b16 %v619
    %v813 = vunpack.c.h.b16 %v619
    %v814 = vunpack.c.l.b16 %v620
    %v815 = vunpack.c.h.b16 %v620
    %v816 = vunpack.c.l.b16 %v621
    %v817 = vunpack.c.h.b16 %v621
    %v818 = vunpack.c.l.b16 %v622
    %v819 = vunpack.c.h.b16 %v622
    %v820 = vunpack.c.l.b16 %v623
    %v821 = vunpack.c.h.b16 %v623
    %v822 = vunpack.c.l.b16 %v624
    %v823 = vunpack.c.h.b16 %v624
    %v824 = vunpack.c.l.b16 %v625
    %v825 = vunpack.c.h.b16 %v625
    %v826 = vunpack.c.l.b16 %v626
    %v827 = vunpack.c.h.b16 %v626
    %v828 = vunpack.c.l.b16 %v627
    %v829 = vunpack.c.h.b16 %v627
    %v830 = vunpack.c.l.b16 %v628
    %v831 = vunpack.c.h.b16 %v628
    %v832 = vunpack.c.l.b16 %v629
    %v833 = vunpack.c.h.b16 %v629
    %v834 = vpack.c.b16 %v708, %v706
    %v835 = vpack.c.b16 %v709, %v707
    %v836 = vpack.c.b16 %v712, %v710
    %v837 = vpack.c.b16 %v713, %v711
    %v838 = vpack.c.b16 %v716, %v714
    %v839 = vpack.c.b16 %v717, %v715
    %v840 = vpack.c.b16 %v720, %v718
    %v841 = vpack.c.b16 %v721, %v719
    %v842 = vpack.c.b16 %v724, %v722
    %v843 = vpack.c.b16 %v725, %v723
    %v844 = vpack.c.b16 %v728, %v726
    %v845 = vpack.c.b16 %v729, %v727
    %v846 = vpack.c.b16 %v732, %v730
    %v847 = vpack.c.b16 %v733, %v731
    %v848 = vpack.c.b16 %v736, %v734
    %v849 = vpack.c.b16 %v737, %v735
    %v850 = vpack.c.b16 %v740, %v738
    %v851 = vpack.c.b16 %v741, %v739
    %v852 = vpack.c.b16 %v744, %v742
    %v853 = vpack.c.b16 %v745, %v743
    %v854 = vpack.c.b16 %v748, %v746
    %v855 = vpack.c.b16 %v749, %v747
    %v856 = vpack.c.b16 %v752, %v750
    %v857 = vpack.c.b16 %v753, %v751
    %v858 = vpack.c.b16 %v756, %v754
    %v859 = vpack.c.b16 %v757, %v755
    %v860 = vpack.c.b16 %v760, %v758
    %v861 = vpack.c.b16 %v761, %v759
    %v862 = vpack.c.b16 %v764, %v762
    %v863 = vpack.c.b16 %v765, %v763
    %v864 = vpack.c.b16 %v768, %v766
    %v865 = vpack.c.b16 %v769, %v767
    %v866 = vpack.c.b16 %v772, %v770
    %v867 = vpack.c.b16 %v773, %v771
    %v868 = vpack.c.b16 %v776, %v774
    %v869 = vpack.c.b16 %v777, %v775
    %v870 = vpack.c.b16 %v780, %v778
    %v871 = vpack.c.b16 %v781, %v779
    %v872 = vpack.c.b16 %v784, %v782
    %v873 = vpack.c.b16 %v785, %v783
    %v874 = vpack.c.b16 %v788, %v786
    %v875 = vpack.c.b16 %v789, %v787
    %v876 = vpack.c.b16 %v792, %v790
    %v877 = vpack.c.b16 %v793, %v791
    %v878 = vpack.c.b16 %v796, %v794
    %v879 = vpack.c.b16 %v797, %v795
    %v880 = vpack.c.b16 %v800, %v798
    %v881 = vpack.c.b16 %v801, %v799
    %v882 = vpack.c.b16 %v804, %v802
    %v883 = vpack.c.b16 %v805, %v803
    %v884 = vpack.c.b16 %v808, %v806
    %v885 = vpack.c.b16 %v809, %v807
    %v886 = vpack.c.b16 %v812, %v810
    %v887 = vpack.c.b16 %v813, %v811
    %v888 = vpack.c.b16 %v816, %v814
    %v889 = vpack.c.b16 %v817, %v815
    %v890 = vpack.c.b16 %v820, %v818
    %v891 = vpack.c.b16 %v821, %v819
    %v892 = vpack.c.b16 %v824, %v822
    %v893 = vpack.c.b16 %v825, %v823
    %v894 = vpack.c.b16 %v828, %v826
    %v895 = vpack.c.b16 %v829, %v827
    %v896 = vpack.c.b16 %v832, %v830
    %v897 = vpack.c.b16 %v833, %v831
    %962 = vmatprep.subr.bf16.mxu0 %v849
    %963 = vmatpush1.bf16.msra.mxu0 %v848
    %964 = vmatprep.subr.bf16.mxu0 %v847
    %965 = vmatpush1.bf16.msra.mxu0 %v846
    %966 = vmatprep.subr.bf16.mxu0 %v845
    %967 = vmatpush1.bf16.msra.mxu0 %v844
    %968 = vmatprep.subr.bf16.mxu0 %v843
    %969 = vmatpush1.bf16.msra.mxu0 %v842
    %970 = vmatprep.subr.bf16.mxu0 %v841
    %971 = vmatpush1.bf16.msra.mxu0 %v840
    %972 = vmatprep.subr.bf16.mxu0 %v839
    %973 = vmatpush1.bf16.msra.mxu0 %v838
    %974 = vmatprep.subr.bf16.mxu0 %v837
    %975 = vmatpush1.bf16.msra.mxu0 %v836
    %976 = vmatprep.subr.bf16.mxu0 %v835
    %977 = vmatpush1.bf16.msra.mxu0 %v834
    %978 = vmatprep.subr.bf16.mxu0 %v865
    %979 = vmatpush2.bf16.msra.mxu0 %v864
    %980 = vmatprep.subr.bf16.mxu0 %v863
    %981 = vmatpush2.bf16.msra.mxu0 %v862
    %982 = vmatprep.subr.bf16.mxu0 %v861
    %983 = vmatpush2.bf16.msra.mxu0 %v860
    %984 = vmatprep.subr.bf16.mxu0 %v859
    %985 = vmatpush2.bf16.msra.mxu0 %v858
    %986 = vmatprep.subr.bf16.mxu0 %v857
    %987 = vmatpush2.bf16.msra.mxu0 %v856
    %988 = vmatprep.subr.bf16.mxu0 %v855
    %989 = vmatpush2.bf16.msra.mxu0 %v854
    %990 = vmatprep.subr.bf16.mxu0 %v853
    %991 = vmatpush2.bf16.msra.mxu0 %v852
    %992 = vmatprep.subr.bf16.mxu0 %v851
    %993 = vmatpush2.bf16.msra.mxu0 %v850
    %994 = vmatprep.mubr.bf16.mxu0 %v563
    %995 = vmatmul.mubr.bf16.gmra.mxu0 %v562
    %v996 = vpop.f32.mrf.mxu0
    %v997 = vadd.f32 %v635, %v996
    %v998 = vpop.f32.mrf.mxu0
    %v999 = vadd.f32 %v639, %v998
    %v1000 = vpop.f32.mrf.mxu0
    %v1001 = vpop.f32.mrf.mxu0
    %1002 = vdwg.mxu0
    %1003 = vmatprep.subr.bf16.mxu0 %v881
    %1004 = vmatpush1.bf16.msra.mxu0 %v880
    %1005 = vmatprep.subr.bf16.mxu0 %v879
    %1006 = vmatpush1.bf16.msra.mxu0 %v878
    %1007 = vmatprep.subr.bf16.mxu0 %v877
    %1008 = vmatpush1.bf16.msra.mxu0 %v876
    %1009 = vmatprep.subr.bf16.mxu0 %v875
    %1010 = vmatpush1.bf16.msra.mxu0 %v874
    %1011 = vmatprep.subr.bf16.mxu0 %v873
    %1012 = vmatpush1.bf16.msra.mxu0 %v872
    %1013 = vmatprep.subr.bf16.mxu0 %v871
    %1014 = vmatpush1.bf16.msra.mxu0 %v870
    %1015 = vmatprep.subr.bf16.mxu0 %v869
    %1016 = vmatpush1.bf16.msra.mxu0 %v868
    %1017 = vmatprep.subr.bf16.mxu0 %v867
    %1018 = vmatpush1.bf16.msra.mxu0 %v866
    %1019 = vmatprep.subr.bf16.mxu0 %v897
    %1020 = vmatpush2.bf16.msra.mxu0 %v896
    %1021 = vmatprep.subr.bf16.mxu0 %v895
    %1022 = vmatpush2.bf16.msra.mxu0 %v894
    %1023 = vmatprep.subr.bf16.mxu0 %v893
    %1024 = vmatpush2.bf16.msra.mxu0 %v892
    %1025 = vmatprep.subr.bf16.mxu0 %v891
    %1026 = vmatpush2.bf16.msra.mxu0 %v890
    %1027 = vmatprep.subr.bf16.mxu0 %v889
    %1028 = vmatpush2.bf16.msra.mxu0 %v888
    %1029 = vmatprep.subr.bf16.mxu0 %v887
    %1030 = vmatpush2.bf16.msra.mxu0 %v886
    %1031 = vmatprep.subr.bf16.mxu0 %v885
    %1032 = vmatpush2.bf16.msra.mxu0 %v884
    %1033 = vmatprep.subr.bf16.mxu0 %v883
    %1034 = vmatpush2.bf16.msra.mxu0 %v882
    %1035 = vmatprep.mubr.bf16.mxu0 %v565
    %1036 = vmatmul.mubr.bf16.gmra.mxu0 %v564
    %v1037 = vpop.f32.mrf.mxu0
    %v1038 = vadd.f32 %v997, %v1037
    %v1039 = vpop.f32.mrf.mxu0
    %v1040 = vadd.f32 %v999, %v1039
    %v1041 = vpop.f32.mrf.mxu0
    %v1042 = vpop.f32.mrf.mxu0
    %1043 = vdwg.mxu0
    %v1044 = vmul.f32 %v1038, 0.2
    %v1045 = vmul.f32 %v1040, 0.2
    %v1046 = vmax.f32 %v1038, %v1044
    %v1047 = vmax.f32 %v1040, %v1045
    %v1048 = vpack.c.bf16 %v1046, %v1046
    %v1049 = vpack.c.bf16 %v1047, %v1047
    %v1050 = vld [vmem:[%s5] sm:$0xf]
    %v1051 = vld [vmem:[%s5 + $0x4] sm:$0xf]
    %v1052 = vld [vmem:[%s5 + $0x8] sm:$0xf]
    %v1053 = vld [vmem:[%s5 + $0xc] sm:$0xf]
    %v1054 = vld [vmem:[%s5 + $0x10] sm:$0xf]
    %v1055 = vld [vmem:[%s5 + $0x14] sm:$0xf]
    %v1056 = vld [vmem:[%s5 + $0x18] sm:$0xf]
    %v1057 = vld [vmem:[%s5 + $0x1c] sm:$0xf]
    %v1058 = vld [vmem:[%s5 + $0x20] sm:$0xf]
    %v1059 = vld [vmem:[%s5 + $0x24] sm:$0xf]
    %v1060 = vld [vmem:[%s5 + $0x28] sm:$0xf]
    %v1061 = vld [vmem:[%s5 + $0x2c] sm:$0xf]
    %v1062 = vld [vmem:[%s5 + $0x30] sm:$0xf]
    %v1063 = vld [vmem:[%s5 + $0x34] sm:$0xf]
    %v1064 = vld [vmem:[%s5 + $0x38] sm:$0xf]
    %v1065 = vld [vmem:[%s5 + $0x3c] sm:$0xf]
    %v1066 = vld [vmem:[%s5 + $0x40] sm:$0xf]
    %v1067 = vld [vmem:[%s5 + $0x44] sm:$0xf]
    %v1068 = vld [vmem:[%s5 + $0x48] sm:$0xf]
    %v1069 = vld [vmem:[%s5 + $0x4c] sm:$0xf]
    %v1070 = vld [vmem:[%s5 + $0x50] sm:$0xf]
    %v1071 = vld [vmem:[%s5 + $0x54] sm:$0xf]
    %v1072 = vld [vmem:[%s5 + $0x58] sm:$0xf]
    %v1073 = vld [vmem:[%s5 + $0x5c] sm:$0xf]
    %v1074 = vld [vmem:[%s5 + $0x60] sm:$0xf]
    %v1075 = vld [vmem:[%s5 + $0x64] sm:$0xf]
    %v1076 = vld [vmem:[%s5 + $0x68] sm:$0xf]
    %v1077 = vld [vmem:[%s5 + $0x6c] sm:$0xf]
    %v1078 = vld [vmem:[%s5 + $0x70] sm:$0xf]
    %v1079 = vld [vmem:[%s5 + $0x74] sm:$0xf]
    %v1080 = vld [vmem:[%s5 + $0x78] sm:$0xf]
    %v1081 = vld [vmem:[%s5 + $0x7c] sm:$0xf]
    %v1082 = vld [vmem:[%s6] sm:$0x1]
    %v1084 = vlaneseq
    %v1085 = vshrl.u32 %v1084, 7
    %v1086 = vsub.s32 0, %v1085
    %v1087 = vrot.slane %v1082, %v1086
    %v1121 = vunpack.c.l.b16 %v1050
    %v1122 = vunpack.c.l.b16 %v1051
    %v1123 = vunpack.c.l.b16 %v1052
    %v1124 = vunpack.c.l.b16 %v1053
    %v1125 = vunpack.c.l.b16 %v1054
    %v1126 = vunpack.c.l.b16 %v1055
    %v1127 = vunpack.c.l.b16 %v1056
    %v1128 = vunpack.c.l.b16 %v1057
    %v1129 = vunpack.c.l.b16 %v1058
    %v1130 = vunpack.c.l.b16 %v1059
    %v1131 = vunpack.c.l.b16 %v1060
    %v1132 = vunpack.c.l.b16 %v1061
    %v1133 = vunpack.c.l.b16 %v1062
    %v1134 = vunpack.c.l.b16 %v1063
    %v1135 = vunpack.c.l.b16 %v1064
    %v1136 = vunpack.c.l.b16 %v1065
    %v1137 = vunpack.c.l.b16 %v1066
    %v1138 = vunpack.c.l.b16 %v1067
    %v1139 = vunpack.c.l.b16 %v1068
    %v1140 = vunpack.c.l.b16 %v1069
    %v1141 = vunpack.c.l.b16 %v1070
    %v1142 = vunpack.c.l.b16 %v1071
    %v1143 = vunpack.c.l.b16 %v1072
    %v1144 = vunpack.c.l.b16 %v1073
    %v1145 = vunpack.c.l.b16 %v1074
    %v1146 = vunpack.c.l.b16 %v1075
    %v1147 = vunpack.c.l.b16 %v1076
    %v1148 = vunpack.c.l.b16 %v1077
    %v1149 = vunpack.c.l.b16 %v1078
    %v1150 = vunpack.c.l.b16 %v1079
    %v1151 = vunpack.c.l.b16 %v1080
    %v1152 = vunpack.c.l.b16 %v1081
    %v1153 = vpack.c.b16 %v1122, %v1121
    %v1154 = vpack.c.b16 %v1124, %v1123
    %v1155 = vpack.c.b16 %v1126, %v1125
    %v1156 = vpack.c.b16 %v1128, %v1127
    %v1157 = vpack.c.b16 %v1130, %v1129
    %v1158 = vpack.c.b16 %v1132, %v1131
    %v1159 = vpack.c.b16 %v1134, %v1133
    %v1160 = vpack.c.b16 %v1136, %v1135
    %v1161 = vpack.c.b16 %v1138, %v1137
    %v1162 = vpack.c.b16 %v1140, %v1139
    %v1163 = vpack.c.b16 %v1142, %v1141
    %v1164 = vpack.c.b16 %v1144, %v1143
    %v1165 = vpack.c.b16 %v1146, %v1145
    %v1166 = vpack.c.b16 %v1148, %v1147
    %v1167 = vpack.c.b16 %v1150, %v1149
    %v1168 = vpack.c.b16 %v1152, %v1151
    %1185 = vmatprep.subr.bf16.mxu0 0
    %1186 = vmatpush1.bf16.msra.mxu0 %v1160
    %1187 = vmatprep.subr.bf16.mxu0 0
    %1188 = vmatpush1.bf16.msra.mxu0 %v1159
    %1189 = vmatprep.subr.bf16.mxu0 0
    %1190 = vmatpush1.bf16.msra.mxu0 %v1158
    %1191 = vmatprep.subr.bf16.mxu0 0
    %1192 = vmatpush1.bf16.msra.mxu0 %v1157
    %1193 = vmatprep.subr.bf16.mxu0 0
    %1194 = vmatpush1.bf16.msra.mxu0 %v1156
    %1195 = vmatprep.subr.bf16.mxu0 0
    %1196 = vmatpush1.bf16.msra.mxu0 %v1155
    %1197 = vmatprep.subr.bf16.mxu0 0
    %1198 = vmatpush1.bf16.msra.mxu0 %v1154
    %1199 = vmatprep.subr.bf16.mxu0 0
    %1200 = vmatpush1.bf16.msra.mxu0 %v1153
    %1201 = vmatprep.subr.bf16.mxu0 0
    %1202 = vmatpush2.bf16.msra.mxu0 %v1168
    %1203 = vmatprep.subr.bf16.mxu0 0
    %1204 = vmatpush2.bf16.msra.mxu0 %v1167
    %1205 = vmatprep.subr.bf16.mxu0 0
    %1206 = vmatpush2.bf16.msra.mxu0 %v1166
    %1207 = vmatprep.subr.bf16.mxu0 0
    %1208 = vmatpush2.bf16.msra.mxu0 %v1165
    %1209 = vmatprep.subr.bf16.mxu0 0
    %1210 = vmatpush2.bf16.msra.mxu0 %v1164
    %1211 = vmatprep.subr.bf16.mxu0 0
    %1212 = vmatpush2.bf16.msra.mxu0 %v1163
    %1213 = vmatprep.subr.bf16.mxu0 0
    %1214 = vmatpush2.bf16.msra.mxu0 %v1162
    %1215 = vmatprep.subr.bf16.mxu0 0
    %1216 = vmatpush2.bf16.msra.mxu0 %v1161
    %1217 = vmatprep.mubr.bf16.mxu0 %v1049
    %1218 = vmatmul.mubr.bf16.gmra.mxu0 %v1048
    %v1219 = vpop.f32.mrf.mxu0
    %v1220 = vadd.f32 %v1087, %v1219
    %v1221 = vpop.f32.mrf.mxu0
    %v1222 = vpop.f32.mrf.mxu0
    %v1223 = vpop.f32.mrf.mxu0
    %1224 = vdwg.mxu0
    %v1225 = vand.u32 2147483647, %v1220
    %v1226 = vsub.f32 0.0, %v1225
    %v1227 = vmul.f32 %v1226, 1.442695
    %v1228 = vpow.pop %v1227
    %v1229 = vadd.f32 %v1228, 1.0
    %v1230 = vrcp.pop %v1229
    %vm1231 = vcmp.ge.f32.partialorder %v1220, 0.0
    %v1232 = vmul.f32 %v1228, %v1230
    %v1233 = vsel %vm1231, %v1230, %v1232
    %1234 = vst [vmem:[%s7] sm:$0xff] %v1233
  $region37: #{discriminator_forward.1} parent=0 // pred_fallthru
    _
  // Predicated region
  $region38: #{discriminator_forward.1} parent=0 // pred_check
    _
  $region39: #{discriminator_forward.1} parent=0 // pred_check_branch
    %1236 = sbr.rel (0) target = $region41
  $region40: #{discriminator_forward.1} parent=0 // pred_region
    _
  $region41: #{discriminator_forward.1} parent=0 // pred_fallthru
    _
  // Predicated region
  $region42: #{discriminator_forward.1} parent=0 // pred_check
    _
  $region43: #{discriminator_forward.1} parent=0 // pred_check_branch
    %1238 = sbr.rel (0) target = $region45
  $region44: #{discriminator_forward.1} parent=0 // pred_region
    _
  $region45: #{discriminator_forward.1} parent=0 // pred_fallthru
    _

</llo_original>
